<compile_context>
chip_gen: v5e
topology: v5e:2x2
jax: 0.10.0
libtpu: 0.0.40
codegen_flags: <defaults>
</compile_context>

<pallas_src>
import functools

import jax
import jax.numpy as jnp
from jax import lax
from jax.experimental import pallas as pl
from jax.experimental.pallas import tpu as pltpu


def _choose_place_kernel(emb_ref, w_ref, mask_ref, b_ref,
                         probs_ref, place_ref, p_ref, lp_ref, *, num_masks):
    emb = emb_ref[...]                                   # (TB, C, H) f32
    w = w_ref[...]                                       # (1, 1, H)  f32

    # Linear(H -> 1): VPU elementwise multiply + XLU lane reduce (no MXU —
    # an M=1, K=32 matmul would use <1% of the systolic array).
    scores = jnp.sum(emb * w, axis=-1) + b_ref[0]        # (TB, C)

    # Mask penalties: one stacked (K, TB, C) input, -1e30 per set flag
    # (matches the PyTorch additive semantics exactly).
    neg = jnp.float32(-1e30)
    for k in range(num_masks):                           # static unroll (K<=3)
        scores = scores + jnp.where(mask_ref[k] == 1.0, neg, 0.0)

    # Numerically stable softmax along the candidate axis.
    m = jnp.max(scores, axis=1, keepdims=True)           # (TB, 1)
    e = jnp.exp(scores - m)                              # (TB, C)
    s = jnp.sum(e, axis=1, keepdims=True)                # (TB, 1)
    inv_s = pl.reciprocal(s, approx=False)               # EUP slot
    log_s = jnp.log(s)

    probs_ref[...] = e * inv_s                           # (TB, C)

    # Fused selection: argmax(probs) == argmax(scores); first-max index,
    # same tie behavior as jnp.argmax.
    C = scores.shape[1]
    idx = lax.broadcasted_iota(jnp.int32, scores.shape, 1)
    place = jnp.min(jnp.where(scores == m, idx, jnp.int32(C)),
                    axis=1, keepdims=True)               # (TB, 1) int32
    place_ref[...] = place

    # probs[place] = exp(m - m)/s = 1/s ; log_probs[place] = -log(s).
    p_ref[...] = inv_s
    lp_ref[...] = -log_s


def _pad_batch(x, b_pad):
    b = x.shape[0]
    if b == b_pad:
        return x
    return jnp.pad(x, [(0, b_pad - b)] + [(0, 0)] * (x.ndim - 1))


def choose_place_batched(emb, weight, bias, silent_np, decision, unsound, *,
                         training=False, block_b=8):
    """Run the fused linear + mask + softmax + argmax kernel over B steps.

    emb:      (B, C, H) f32 -- candidate embeddings for B decision steps
    weight:   (1, H)    f32 -- nn.Linear(node_hidden_size, 1).weight
    bias:     (1,)      f32 -- nn.Linear(node_hidden_size, 1).bias
    silent_np / decision / unsound: (B, C) f32 node-feature flags
    returns: probs (B, C), place (B,), prob_of_place (B,), log_prob_of_place (B,)
    """
    emb = jnp.asarray(emb, jnp.float32)
    B, C, H = emb.shape

    masks = [silent_np, decision] if training else [silent_np, decision, unsound]
    masks = [jnp.asarray(m, jnp.float32).reshape(B, C) for m in masks]
    K = len(masks)

    Bp = ((B + block_b - 1) // block_b) * block_b
    emb_p = _pad_batch(emb, Bp)                                  # (Bp, C, H)
    mask_p = jnp.stack([_pad_batch(m, Bp) for m in masks], 0)    # (K, Bp, C)
    w3 = jnp.asarray(weight, jnp.float32).reshape(1, 1, H)
    b1 = jnp.asarray(bias, jnp.float32).reshape(1)

    kernel = functools.partial(_choose_place_kernel, num_masks=K)
    grid = (Bp // block_b,)

    probs, place, p_place, lp_place = pl.pallas_call(
        kernel,
        out_shape=(jax.ShapeDtypeStruct((Bp, C), jnp.float32),
                   jax.ShapeDtypeStruct((Bp, 1), jnp.int32),
                   jax.ShapeDtypeStruct((Bp, 1), jnp.float32),
                   jax.ShapeDtypeStruct((Bp, 1), jnp.float32)),
        grid=grid,
        in_specs=[
            pl.BlockSpec((block_b, C, H), lambda b: (b, 0, 0)),   # embeddings
            pl.BlockSpec((1, 1, H), lambda b: (0, 0, 0)),         # weight
            pl.BlockSpec((K, block_b, C), lambda b: (0, b, 0)),   # stacked masks
            pl.BlockSpec(memory_space=pltpu.MemorySpace.SMEM),    # bias scalar
        ],
        out_specs=(
            pl.BlockSpec((block_b, C), lambda b: (b, 0)),
            pl.BlockSpec((block_b, 1), lambda b: (b, 0)),
            pl.BlockSpec((block_b, 1), lambda b: (b, 0)),
            pl.BlockSpec((block_b, 1), lambda b: (b, 0)),
        ),
        compiler_params=pltpu.CompilerParams(
            dimension_semantics=("parallel",)),
    )(emb_p, w3, mask_p, b1)

    return (probs[:B], place[:B, 0], p_place[:B, 0], lp_place[:B, 0])


def choose_place_forward(embeddings, weight, bias, silent_np, decision, unsound,
                         number_of_candidates, *, training=False,
                         return_probs=False):
    """Mirrors a single ChoosePlaceAgent.forward call (deterministic selection)."""
    C = number_of_candidates
    emb_c = embeddings[-C:][None]             # (1, C, H)
    sil_c = silent_np[-C:][None]
    dec_c = decision[-C:][None]
    uns_c = unsound[-C:][None]
    probs, place, p_place, lp_place = choose_place_batched(
        emb_c, weight, bias, sil_c, dec_c, uns_c, training=training)
    if return_probs:
        return probs[0]
    # TODO(synk): Categorical sampling / top-k tie-break with np.random.choice
    # (and the graph 'decision' flag mutation) have no clean Pallas equivalent;
    # deterministic in-kernel argmax selection is used instead.
    return place[0], p_place[0], lp_place[0], probs[0]


def _reference(emb, weight, bias, silent, decision, unsound, training):
    """Plain-JAX reference mirroring the PyTorch math."""
    scores = jnp.einsum('bch,h->bc', emb, weight.reshape(-1)) + bias[0]
    neg = jnp.float32(-1e30)
    scores = scores + (silent == 1.0) * neg + (decision == 1.0) * neg
    if not training:
        scores = scores + (unsound == 1.0) * neg
    probs = jax.nn.softmax(scores, axis=1)
    logp = jax.nn.log_softmax(scores, axis=1)
    place = jnp.argmax(probs, axis=1)
    return probs, logp, place


if __name__ == "__main__":
    key = jax.random.PRNGKey(0)
    node_hidden_size = 32          # H
    number_of_candidates = 8       # C
    batch_steps = 8                # B decision steps fused into one call
    n_nodes = 12

    k_emb, k_w, k_b, k_s, k_u, k_e2 = jax.random.split(key, 6)

    # Deterministic "Linear(node_hidden_size, 1)" parameters.
    weight = jax.random.normal(k_w, (1, node_hidden_size), jnp.float32) * 0.1
    bias = jax.random.normal(k_b, (1,), jnp.float32) * 0.1

    # ---- Batched path: B independent decision steps in one pallas_call ----
    emb_b = jax.random.normal(k_emb, (batch_steps, number_of_candidates,
                                      node_hidden_size), jnp.float32)
    silent = (jax.random.uniform(k_s, (batch_steps, number_of_candidates))
              < 0.25).astype(jnp.float32)
    decision = jnp.zeros((batch_steps, number_of_candidates), jnp.float32)
    unsound = (jax.random.uniform(k_u, (batch_steps, number_of_candidates))
               < 0.25).astype(jnp.float32)
    # Make sure at least one candidate per step is viable.
    silent = silent.at[:, -1].set(0.0)
    unsound = unsound.at[:, -1].set(0.0)

    probs, place, p_place, lp_place = choose_place_batched(
        emb_b, weight, bias, silent, decision, unsound, training=False)
    jax.block_until_ready((probs, place, p_place, lp_place))

    ref_probs, ref_logp, ref_place = _reference(
        emb_b, weight, bias, silent, decision, unsound, training=False)
    rows = jnp.arange(batch_steps)
    assert jnp.allclose(probs, ref_probs, atol=1e-5, rtol=1e-5)
    assert jnp.array_equal(place, ref_place)
    assert jnp.allclose(p_place, ref_probs[rows, ref_place], atol=1e-5, rtol=1e-5)
    assert jnp.allclose(lp_place, ref_logp[rows, ref_place], atol=1e-4, rtol=1e-4)

    # ---- Single-step path mirroring ChoosePlaceAgent.forward ----
    embeddings = jax.random.normal(k_e2, (n_nodes, node_hidden_size), jnp.float32)
    sil_n = jnp.zeros((n_nodes,), jnp.float32).at[-3].set(1.0)
    dec_n = jnp.zeros((n_nodes,), jnp.float32)
    uns_n = jnp.zeros((n_nodes,), jnp.float32).at[-2].set(1.0)

    place1, p1, lp1, probs1 = choose_place_forward(
        embeddings, weight, bias, sil_n, dec_n, uns_n,
        number_of_candidates, training=False)
    jax.block_until_ready((place1, p1, lp1, probs1))

    ref_p1, ref_lp1, ref_pl1 = _reference(
        embeddings[-number_of_candidates:][None], weight, bias,
        sil_n[-number_of_candidates:][None],
        dec_n[-number_of_candidates:][None],
        uns_n[-number_of_candidates:][None], training=False)
    assert jnp.allclose(probs1, ref_p1[0], atol=1e-5, rtol=1e-5)
    assert int(place1) == int(ref_pl1[0])
    assert jnp.allclose(lp1, ref_lp1[0, int(place1)], atol=1e-4, rtol=1e-4)

    print("KERNEL_OK")
</pallas_src>

<mosaic_0001>
module attributes {stable_mosaic.version = 11 : i64} {
  func.func @_choose_place_kernel(%arg0: i32, %arg1: memref<8x8x32xf32, #tpu.memory_space<vmem>>, %arg2: memref<1x1x32xf32, #tpu.memory_space<vmem>>, %arg3: memref<3x8x8xf32, #tpu.memory_space<vmem>>, %arg4: memref<1xf32, #tpu.memory_space<smem>>, %arg5: memref<8x8xf32, #tpu.memory_space<vmem>>, %arg6: memref<8x1xi32, #tpu.memory_space<vmem>>, %arg7: memref<8x1xf32, #tpu.memory_space<vmem>>, %arg8: memref<8x1xf32, #tpu.memory_space<vmem>>) attributes {dimension_semantics = [#tpu.dimension_semantics<parallel>], iteration_bounds = array<i64: 1>, scalar_prefetch = 0 : i64, scratch_operands = 0 : i64, tpu.core_type = #tpu.core_type<tc>, window_params = [{transform_indices = @transform_0, window_bounds = array<i64: 8, 8, 32>}, {pipeline_mode = #tpu.pipeline_mode<synchronous>, transform_indices = @transform_1, window_bounds = array<i64: 1, 1, 32>}, {transform_indices = @transform_2, window_bounds = array<i64: 3, 8, 8>}, {transform_indices = @transform_3, window_bounds = array<i64: 1>}, {transform_indices = @transform_4, window_bounds = array<i64: 8, 8>}, {transform_indices = @transform_5, window_bounds = array<i64: 8, 1>}, {transform_indices = @transform_6, window_bounds = array<i64: 8, 1>}, {transform_indices = @transform_7, window_bounds = array<i64: 8, 1>}]} {
    %c0 = arith.constant 0 : index
    %c0_0 = arith.constant 0 : index
    %c0_1 = arith.constant 0 : index
    %0 = vector.load %arg1[%c0, %c0_0, %c0_1] : memref<8x8x32xf32, #tpu.memory_space<vmem>>, vector<8x8x32xf32>
    %c0_2 = arith.constant 0 : index
    %c0_3 = arith.constant 0 : index
    %c0_4 = arith.constant 0 : index
    %1 = vector.load %arg2[%c0_2, %c0_3, %c0_4] : memref<1x1x32xf32, #tpu.memory_space<vmem>>, vector<1x1x32xf32>
    %2 = vector.broadcast %1 : vector<1x1x32xf32> to vector<8x8x32xf32>
    %3 = arith.mulf %0, %2 : vector<8x8x32xf32>
    %cst = arith.constant dense<0.000000e+00> : vector<8x8xf32>
    %4 = vector.multi_reduction <add>, %3, %cst [2] : vector<8x8x32xf32> to vector<8x8xf32>
    %c0_5 = arith.constant 0 : index
    %5 = memref.load %arg4[%c0_5] : memref<1xf32, #tpu.memory_space<smem>>
    %6 = vector.broadcast %5 : f32 to vector<8x8xf32>
    %7 = arith.addf %4, %6 : vector<8x8xf32>
    %c0_6 = arith.constant 0 : index
    %c0_7 = arith.constant 0 : index
    %c0_8 = arith.constant 0 : index
    %8 = vector.load %arg3[%c0_6, %c0_7, %c0_8] : memref<3x8x8xf32, #tpu.memory_space<vmem>>, vector<1x8x8xf32>
    %9 = vector.shape_cast %8 : vector<1x8x8xf32> to vector<8x8xf32>
    %cst_9 = arith.constant 1.000000e+00 : f32
    %10 = vector.broadcast %cst_9 : f32 to vector<8x8xf32>
    %11 = arith.cmpf oeq, %9, %10 : vector<8x8xf32>
    %cst_10 = arith.constant -1.000000e+30 : f32
    %cst_11 = arith.constant 0.000000e+00 : f32
    %12 = vector.broadcast %cst_10 : f32 to vector<8x8xf32>
    %13 = vector.broadcast %cst_11 : f32 to vector<8x8xf32>
    %14 = arith.select %11, %12, %13 : vector<8x8xi1>, vector<8x8xf32>
    %15 = arith.addf %7, %14 : vector<8x8xf32>
    %c1 = arith.constant 1 : index
    %c0_12 = arith.constant 0 : index
    %c0_13 = arith.constant 0 : index
    %16 = vector.load %arg3[%c1, %c0_12, %c0_13] : memref<3x8x8xf32, #tpu.memory_space<vmem>>, vector<1x8x8xf32>
    %17 = vector.shape_cast %16 : vector<1x8x8xf32> to vector<8x8xf32>
    %cst_14 = arith.constant 1.000000e+00 : f32
    %18 = vector.broadcast %cst_14 : f32 to vector<8x8xf32>
    %19 = arith.cmpf oeq, %17, %18 : vector<8x8xf32>
    %cst_15 = arith.constant -1.000000e+30 : f32
    %cst_16 = arith.constant 0.000000e+00 : f32
    %20 = vector.broadcast %cst_15 : f32 to vector<8x8xf32>
    %21 = vector.broadcast %cst_16 : f32 to vector<8x8xf32>
    %22 = arith.select %19, %20, %21 : vector<8x8xi1>, vector<8x8xf32>
    %23 = arith.addf %15, %22 : vector<8x8xf32>
    %c2 = arith.constant 2 : index
    %c0_17 = arith.constant 0 : index
    %c0_18 = arith.constant 0 : index
    %24 = vector.load %arg3[%c2, %c0_17, %c0_18] : memref<3x8x8xf32, #tpu.memory_space<vmem>>, vector<1x8x8xf32>
    %25 = vector.shape_cast %24 : vector<1x8x8xf32> to vector<8x8xf32>
    %cst_19 = arith.constant 1.000000e+00 : f32
    %26 = vector.broadcast %cst_19 : f32 to vector<8x8xf32>
    %27 = arith.cmpf oeq, %25, %26 : vector<8x8xf32>
    %cst_20 = arith.constant -1.000000e+30 : f32
    %cst_21 = arith.constant 0.000000e+00 : f32
    %28 = vector.broadcast %cst_20 : f32 to vector<8x8xf32>
    %29 = vector.broadcast %cst_21 : f32 to vector<8x8xf32>
    %30 = arith.select %27, %28, %29 : vector<8x8xi1>, vector<8x8xf32>
    %31 = arith.addf %23, %30 : vector<8x8xf32>
    %cst_22 = arith.constant dense<0xFF800000> : vector<8xf32>
    %32 = vector.multi_reduction <maximumf>, %31, %cst_22 [1] : vector<8x8xf32> to vector<8xf32>
    %33 = vector.shape_cast %32 : vector<8xf32> to vector<8x1xf32>
    %34 = vector.broadcast %33 : vector<8x1xf32> to vector<8x8xf32>
    %35 = arith.subf %31, %34 : vector<8x8xf32>
    %36 = math.exp %35 : vector<8x8xf32>
    %cst_23 = arith.constant dense<0.000000e+00> : vector<8xf32>
    %37 = vector.multi_reduction <add>, %36, %cst_23 [1] : vector<8x8xf32> to vector<8xf32>
    %38 = vector.shape_cast %37 : vector<8xf32> to vector<8x1xf32>
    %39 = tpu.reciprocal %38 : vector<8x1xf32> -> vector<8x1xf32>
    %40 = math.log %38 : vector<8x1xf32>
    %41 = vector.broadcast %39 : vector<8x1xf32> to vector<8x8xf32>
    %42 = arith.mulf %36, %41 : vector<8x8xf32>
    %c0_24 = arith.constant 0 : index
    %c0_25 = arith.constant 0 : index
    %43 = vector.load %arg5[%c0_24, %c0_25] : memref<8x8xf32, #tpu.memory_space<vmem>>, vector<8x8xf32>
    tpu.vector_store %arg5[%c0_24, %c0_25], %42 {strides = array<i32>} : memref<8x8xf32, #tpu.memory_space<vmem>>, vector<8x8xf32>,
    %44 = tpu.iota {dimensions = array<i32: 1>} : vector<8x8xi32>
    %45 = vector.broadcast %33 : vector<8x1xf32> to vector<8x8xf32>
    %46 = arith.cmpf oeq, %31, %45 : vector<8x8xf32>
    %c8_i32 = arith.constant 8 : i32
    %47 = vector.broadcast %c8_i32 : i32 to vector<8x8xi32>
    %48 = arith.select %46, %44, %47 : vector<8x8xi1>, vector<8x8xi32>
    %cst_26 = arith.constant dense<2147483647> : vector<8xi32>
    %49 = vector.multi_reduction <minsi>, %48, %cst_26 [1] : vector<8x8xi32> to vector<8xi32>
    %50 = vector.shape_cast %49 : vector<8xi32> to vector<8x1xi32>
    %c0_27 = arith.constant 0 : index
    %c0_28 = arith.constant 0 : index
    %51 = vector.load %arg6[%c0_27, %c0_28] : memref<8x1xi32, #tpu.memory_space<vmem>>, vector<8x1xi32>
    tpu.vector_store %arg6[%c0_27, %c0_28], %50 {strides = array<i32>} : memref<8x1xi32, #tpu.memory_space<vmem>>, vector<8x1xi32>,
    %c0_29 = arith.constant 0 : index
    %c0_30 = arith.constant 0 : index
    %52 = vector.load %arg7[%c0_29, %c0_30] : memref<8x1xf32, #tpu.memory_space<vmem>>, vector<8x1xf32>
    tpu.vector_store %arg7[%c0_29, %c0_30], %39 {strides = array<i32>} : memref<8x1xf32, #tpu.memory_space<vmem>>, vector<8x1xf32>,
    %cst_31 = arith.constant 0.000000e+00 : f32
    %53 = vector.broadcast %cst_31 : f32 to vector<8x1xf32>
    %54 = arith.subf %53, %40 : vector<8x1xf32>
    %c0_32 = arith.constant 0 : index
    %c0_33 = arith.constant 0 : index
    %55 = vector.load %arg8[%c0_32, %c0_33] : memref<8x1xf32, #tpu.memory_space<vmem>>, vector<8x1xf32>
    tpu.vector_store %arg8[%c0_32, %c0_33], %54 {strides = array<i32>} : memref<8x1xf32, #tpu.memory_space<vmem>>, vector<8x1xf32>,
    return
  }
  func.func @transform_0(%arg0: i32) -> (i32, i32, i32) {
    %c0_i32 = arith.constant 0 : i32
    %c0_i32_0 = arith.constant 0 : i32
    %c0_i32_1 = arith.constant 0 : i32
    return %arg0, %c0_i32, %c0_i32_0 : i32, i32, i32
  }
  func.func @transform_1(%arg0: i32) -> (i32, i32, i32) {
    %c0_i32 = arith.constant 0 : i32
    %c0_i32_0 = arith.constant 0 : i32
    %c0_i32_1 = arith.constant 0 : i32
    %c0_i32_2 = arith.constant 0 : i32
    return %c0_i32, %c0_i32_0, %c0_i32_1 : i32, i32, i32
  }
  func.func @transform_2(%arg0: i32) -> (i32, i32, i32) {
    %c0_i32 = arith.constant 0 : i32
    %c0_i32_0 = arith.constant 0 : i32
    %c0_i32_1 = arith.constant 0 : i32
    return %c0_i32, %arg0, %c0_i32_0 : i32, i32, i32
  }
  func.func @transform_3(%arg0: i32) -> i32 {
    %c0_i32 = arith.constant 0 : i32
    %c0_i32_0 = arith.constant 0 : i32
    return %c0_i32 : i32
  }
  func.func @transform_4(%arg0: i32) -> (i32, i32) {
    %c0_i32 = arith.constant 0 : i32
    %c0_i32_0 = arith.constant 0 : i32
    return %arg0, %c0_i32 : i32, i32
  }
  func.func @transform_5(%arg0: i32) -> (i32, i32) {
    %c0_i32 = arith.constant 0 : i32
    %c0_i32_0 = arith.constant 0 : i32
    return %arg0, %c0_i32 : i32, i32
  }
  func.func @transform_6(%arg0: i32) -> (i32, i32) {
    %c0_i32 = arith.constant 0 : i32
    %c0_i32_0 = arith.constant 0 : i32
    return %arg0, %c0_i32 : i32, i32
  }
  func.func @transform_7(%arg0: i32) -> (i32, i32) {
    %c0_i32 = arith.constant 0 : i32
    %c0_i32_0 = arith.constant 0 : i32
    return %arg0, %c0_i32 : i32, i32
  }
}

</mosaic_0001>

<llo_original>
// kernel: tpu_custom_call.1
$region0: #{tpu_custom_call.1}
  #allocation0 [shape = 'u32[]', space=smem, size = 0x4, offset = 0x4, fixed_abs, tag = 'smem constant byte address 0x4 - core index']
  #allocation1 [shape = 'u32[72,128]{1,0:T(1,128)}', space=vmem, size = 0x9000, scoped, tag = 'internal scratch']
  #allocation2 [shape = 'f32[1]{0:T(128)S(6)}', space=smem, size = 0x200, scoped, tag = 'scoped memory for tpu_custom_call.1']
  %s0 = inlined_call_operand.hbm [shape: f32[8,8,32], index: 0, kind: input, shape index: {}]
  %s1 = inlined_call_operand.vmem [shape: f32[1,1,32], index: 1, kind: input, shape index: {}]
  %s2 = inlined_call_operand.hbm [shape: f32[3,8,8], index: 2, kind: input, shape index: {}]
  %s3 = inlined_call_operand.<no memory space> [shape: f32[1], index: 3, kind: input, shape index: {}]
  %s4 = inlined_call_operand.hbm [shape: f32[8,8], index: 4, kind: output, shape index: {0}]
  %s5 = inlined_call_operand.vmem [shape: s32[8,1], index: 5, kind: output, shape index: {1}]
  %s6 = inlined_call_operand.vmem [shape: f32[8,1], index: 6, kind: output, shape index: {2}]
  %s7 = inlined_call_operand.vmem [shape: f32[8,1], index: 7, kind: output, shape index: {3}]
  %8 = xla_tuple %s4, %s5, %s6, %s7
  %s9 = sld [smem:[#allocation0]]
  $region58: #{tpu_custom_call.1} parent=0
    _
  %s11 = ssub.s32 1, %s9
  %s12 = scalar_select 0, %s11, %s9
  %13 = sst [smem:[#allocation2]] %s3
  $region1: #{tpu_custom_call.1} parent=0
    #allocation3 [shape = 'u8[32768]{0}', space=vmem, size = 0x8000, scoped, tag = 'input window, operand 0, single buffered']
    #allocation4 [shape = 's32[1]{0}', space=sflag, size = 0x4, scoped, tag = 'scoped memory for tpu_custom_call.1']
    #allocation5 [shape = 's32[1]{0}', space=sflag, size = 0x4, scoped, tag = 'scoped memory for tpu_custom_call.1']
    #allocation6 [shape = 'u8[12288]{0}', space=vmem, size = 0x3000, scoped, tag = 'input window, operand 2, single buffered']
    #allocation7 [shape = 's32[1]{0}', space=sflag, size = 0x4, scoped, tag = 'scoped memory for tpu_custom_call.1']
    #allocation8 [shape = 'u8[4096]{0}', space=vmem, size = 0x1000, scoped, tag = 'output window, operand 0, single buffered']
    %14 = vsyncpa [#allocation4], 0
    %15 = vsyncpa [#allocation7], 0
    %16 = vsyncpa [#allocation5], 0
    // Predicated region
    $region2: #{tpu_custom_call.1} parent=1 // pred_check
      _
    $region3: #{tpu_custom_call.1} parent=1 // pred_check_branch
      %18 = sbr.rel (0) target = $region5
    $region4: #{tpu_custom_call.1} parent=1 // pred_region
      %20 = vsyncadd [#allocation4], 0
      %s21 = sshll.u32 %s0, 4
      %s22 = int_to_ptr.hbm [resolvable:$true] %s21
      %s23 = sshll.u32 [#allocation3], 4
      %s24 = int_to_ptr.vmem [resolvable:$true] %s23
      %29 = dma.hbm_to_vmem [thread:$0]  %s22, 1024, %s24, [#allocation4], 128, 128, 8
    $region5: #{tpu_custom_call.1} parent=1 // pred_fallthru
      _
    // Predicated region
    $region6: #{tpu_custom_call.1} parent=1 // pred_check
      _
    $region7: #{tpu_custom_call.1} parent=1 // pred_check_branch
      %31 = sbr.rel (0) target = $region9
    $region8: #{tpu_custom_call.1} parent=1 // pred_region
      _
    $region9: #{tpu_custom_call.1} parent=1 // pred_fallthru
      _
    // Predicated region
    $region10: #{tpu_custom_call.1} parent=1 // pred_check
      _
    $region11: #{tpu_custom_call.1} parent=1 // pred_check_branch
      %33 = sbr.rel (0) target = $region13
    $region12: #{tpu_custom_call.1} parent=1 // pred_region
      %35 = vsyncadd [#allocation7], 0
      %s36 = sshll.u32 %s2, 4
      %s37 = int_to_ptr.hbm [resolvable:$true] %s36
      %s38 = sshll.u32 [#allocation6], 4
      %s39 = int_to_ptr.vmem [resolvable:$true] %s38
      %44 = dma.hbm_to_vmem [thread:$0]  %s37, 384, %s39, [#allocation7], 128, 128, 8
    $region13: #{tpu_custom_call.1} parent=1 // pred_fallthru
      _
    // Predicated region
    $region14: #{tpu_custom_call.1} parent=1 // pred_check
      _
    $region15: #{tpu_custom_call.1} parent=1 // pred_check_branch
      %46 = sbr.rel (0) target = $region17
    $region16: #{tpu_custom_call.1} parent=1 // pred_region
      _
    $region17: #{tpu_custom_call.1} parent=1 // pred_fallthru
      _
    // Predicated region
    $region18: #{tpu_custom_call.1} parent=1 // pred_check
      _
    $region19: #{tpu_custom_call.1} parent=1 // pred_check_branch
      %48 = sbr.rel (0) target = $region21
    $region20: #{tpu_custom_call.1} parent=1 // pred_region
      %50 = dma.done [#allocation4], 1024
    $region21: #{tpu_custom_call.1} parent=1 // pred_fallthru
      _
    // Predicated region
    $region22: #{tpu_custom_call.1} parent=1 // pred_check
      _
    $region23: #{tpu_custom_call.1} parent=1 // pred_check_branch
      %52 = sbr.rel (0) target = $region25
    $region24: #{tpu_custom_call.1} parent=1 // pred_region
      %54 = dma.done [#allocation7], 384
    $region25: #{tpu_custom_call.1} parent=1 // pred_fallthru
      _
    %v55 = vld [vmem:[#allocation3] sm:$0xff]
    %v56 = vld [vmem:[#allocation3 + $0x8] sm:$0xff]
    %v57 = vld [vmem:[#allocation3 + $0x10] sm:$0xff]
    %v58 = vld [vmem:[#allocation3 + $0x18] sm:$0xff]
    %v59 = vld [vmem:[#allocation3 + $0x20] sm:$0xff]
    %v60 = vld [vmem:[#allocation3 + $0x28] sm:$0xff]
    %v61 = vld [vmem:[#allocation3 + $0x30] sm:$0xff]
    %v62 = vld [vmem:[#allocation3 + $0x38] sm:$0xff]
    %v63 = vld [vmem:[%s1] sm:$0x1]
    %v65 = vperm.slane %v63, 0
    %v67 = vmul.f32 %v55, %v65
    %v68 = vmul.f32 %v56, %v65
    %v69 = vmul.f32 %v57, %v65
    %v70 = vmul.f32 %v58, %v65
    %v71 = vmul.f32 %v59, %v65
    %v72 = vmul.f32 %v60, %v65
    %v73 = vmul.f32 %v61, %v65
    %v74 = vmul.f32 %v62, %v65
    %vm75 = vcmask 261120
    %v76 = vsel %vm75, %v67, 0.0
    %77 = vadd.xlane.f32.xlu0 %v76
    %v78 = vpop.xlane.xlu0 %77
    %v79 = vsel %vm75, %v68, 0.0
    %80 = vadd.xlane.f32.xlu0 %v79
    %v81 = vpop.xlane.xlu0 %80
    %v82 = vsel %vm75, %v69, 0.0
    %83 = vadd.xlane.f32.xlu0 %v82
    %v84 = vpop.xlane.xlu0 %83
    %v85 = vsel %vm75, %v70, 0.0
    %86 = vadd.xlane.f32.xlu0 %v85
    %v87 = vpop.xlane.xlu0 %86
    %v88 = vsel %vm75, %v71, 0.0
    %89 = vadd.xlane.f32.xlu0 %v88
    %v90 = vpop.xlane.xlu0 %89
    %v91 = vsel %vm75, %v72, 0.0
    %92 = vadd.xlane.f32.xlu0 %v91
    %v93 = vpop.xlane.xlu0 %92
    %v94 = vsel %vm75, %v73, 0.0
    %95 = vadd.xlane.f32.xlu0 %v94
    %v96 = vpop.xlane.xlu0 %95
    %v97 = vsel %vm75, %v74, 0.0
    %98 = vadd.xlane.f32.xlu0 %v97
    %v99 = vpop.xlane.xlu0 %98
    %s100 = sld [smem:[#allocation2]]
    %v101 = vstv %s100
    %v102 = vadd.f32 %v78, %v101
    %v103 = vadd.f32 %v81, %v101
    %v104 = vadd.f32 %v84, %v101
    %v105 = vadd.f32 %v87, %v101
    %v106 = vadd.f32 %v90, %v101
    %v107 = vadd.f32 %v93, %v101
    %v108 = vadd.f32 %v96, %v101
    %v109 = vadd.f32 %v99, %v101
    %v110 = vld [vmem:[#allocation6] sm:$0xff]
    %vm111 = vcmp.eq.f32.partialorder %v110, 1.0
    %v112 = vsel %vm111, -1e+30, 0.0
    %v114 = vperm.slane %v112, 0
    %v115 = vlaneseq
    %v116 = vshrl.u32 %v115, 7
    %118 = vset.pattern.permute.xlu0 %v116
    %119 = vperm.xlu0 %118, %v114
    %v120 = vpop.permute.xlu0 %119
    %v121 = vperm.slane %v112, 1
    %v122 = vlaneseq
    %v123 = vshrl.u32 %v122, 7
    %125 = vset.pattern.permute.xlu0 %v123
    %126 = vperm.xlu0 %125, %v121
    %v127 = vpop.permute.xlu0 %126
    %v128 = vperm.slane %v112, 2
    %v129 = vlaneseq
    %v130 = vshrl.u32 %v129, 7
    %132 = vset.pattern.permute.xlu0 %v130
    %133 = vperm.xlu0 %132, %v128
    %v134 = vpop.permute.xlu0 %133
    %v135 = vperm.slane %v112, 3
    %v136 = vlaneseq
    %v137 = vshrl.u32 %v136, 7
    %139 = vset.pattern.permute.xlu0 %v137
    %140 = vperm.xlu0 %139, %v135
    %v141 = vpop.permute.xlu0 %140
    %v142 = vperm.slane %v112, 4
    %v143 = vlaneseq
    %v144 = vshrl.u32 %v143, 7
    %146 = vset.pattern.permute.xlu0 %v144
    %147 = vperm.xlu0 %146, %v142
    %v148 = vpop.permute.xlu0 %147
    %v149 = vperm.slane %v112, 5
    %v150 = vlaneseq
    %v151 = vshrl.u32 %v150, 7
    %153 = vset.pattern.permute.xlu0 %v151
    %154 = vperm.xlu0 %153, %v149
    %v155 = vpop.permute.xlu0 %154
    %v156 = vperm.slane %v112, 6
    %v157 = vlaneseq
    %v158 = vshrl.u32 %v157, 7
    %160 = vset.pattern.permute.xlu0 %v158
    %161 = vperm.xlu0 %160, %v156
    %v162 = vpop.permute.xlu0 %161
    %v163 = vperm.slane %v112, 7
    %v164 = vlaneseq
    %v165 = vshrl.u32 %v164, 7
    %167 = vset.pattern.permute.xlu0 %v165
    %168 = vperm.xlu0 %167, %v163
    %v169 = vpop.permute.xlu0 %168
    %v178 = vadd.f32 %v102, %v120
    %v179 = vadd.f32 %v103, %v127
    %v180 = vadd.f32 %v104, %v134
    %v181 = vadd.f32 %v105, %v141
    %v182 = vadd.f32 %v106, %v148
    %v183 = vadd.f32 %v107, %v155
    %v184 = vadd.f32 %v108, %v162
    %v185 = vadd.f32 %v109, %v169
    %s186 = scalar_lea.vmem [#allocation6], 8
    %v187 = vld [vmem:[%s186] sm:$0xff]
    %vm188 = vcmp.eq.f32.partialorder %v187, 1.0
    %v189 = vsel %vm188, -1e+30, 0.0
    %v191 = vperm.slane %v189, 0
    %v192 = vlaneseq
    %v193 = vshrl.u32 %v192, 7
    %195 = vset.pattern.permute.xlu0 %v193
    %196 = vperm.xlu0 %195, %v191
    %v197 = vpop.permute.xlu0 %196
    %v198 = vperm.slane %v189, 1
    %v199 = vlaneseq
    %v200 = vshrl.u32 %v199, 7
    %202 = vset.pattern.permute.xlu0 %v200
    %203 = vperm.xlu0 %202, %v198
    %v204 = vpop.permute.xlu0 %203
    %v205 = vperm.slane %v189, 2
    %v206 = vlaneseq
    %v207 = vshrl.u32 %v206, 7
    %209 = vset.pattern.permute.xlu0 %v207
    %210 = vperm.xlu0 %209, %v205
    %v211 = vpop.permute.xlu0 %210
    %v212 = vperm.slane %v189, 3
    %v213 = vlaneseq
    %v214 = vshrl.u32 %v213, 7
    %216 = vset.pattern.permute.xlu0 %v214
    %217 = vperm.xlu0 %216, %v212
    %v218 = vpop.permute.xlu0 %217
    %v219 = vperm.slane %v189, 4
    %v220 = vlaneseq
    %v221 = vshrl.u32 %v220, 7
    %223 = vset.pattern.permute.xlu0 %v221
    %224 = vperm.xlu0 %223, %v219
    %v225 = vpop.permute.xlu0 %224
    %v226 = vperm.slane %v189, 5
    %v227 = vlaneseq
    %v228 = vshrl.u32 %v227, 7
    %230 = vset.pattern.permute.xlu0 %v228
    %231 = vperm.xlu0 %230, %v226
    %v232 = vpop.permute.xlu0 %231
    %v233 = vperm.slane %v189, 6
    %v234 = vlaneseq
    %v235 = vshrl.u32 %v234, 7
    %237 = vset.pattern.permute.xlu0 %v235
    %238 = vperm.xlu0 %237, %v233
    %v239 = vpop.permute.xlu0 %238
    %v240 = vperm.slane %v189, 7
    %v241 = vlaneseq
    %v242 = vshrl.u32 %v241, 7
    %244 = vset.pattern.permute.xlu0 %v242
    %245 = vperm.xlu0 %244, %v240
    %v246 = vpop.permute.xlu0 %245
    %v255 = vadd.f32 %v178, %v197
    %v256 = vadd.f32 %v179, %v204
    %v257 = vadd.f32 %v180, %v211
    %v258 = vadd.f32 %v181, %v218
    %v259 = vadd.f32 %v182, %v225
    %v260 = vadd.f32 %v183, %v232
    %v261 = vadd.f32 %v184, %v239
    %v262 = vadd.f32 %v185, %v246
    %s263 = scalar_lea.vmem [#allocation6], 16
    %v264 = vld [vmem:[%s263] sm:$0xff]
    %vm265 = vcmp.eq.f32.partialorder %v264, 1.0
    %v266 = vsel %vm265, -1e+30, 0.0
    %v268 = vperm.slane %v266, 0
    %v269 = vlaneseq
    %v270 = vshrl.u32 %v269, 7
    %272 = vset.pattern.permute.xlu0 %v270
    %273 = vperm.xlu0 %272, %v268
    %v274 = vpop.permute.xlu0 %273
    %v275 = vperm.slane %v266, 1
    %v276 = vlaneseq
    %v277 = vshrl.u32 %v276, 7
    %279 = vset.pattern.permute.xlu0 %v277
    %280 = vperm.xlu0 %279, %v275
    %v281 = vpop.permute.xlu0 %280
    %v282 = vperm.slane %v266, 2
    %v283 = vlaneseq
    %v284 = vshrl.u32 %v283, 7
    %286 = vset.pattern.permute.xlu0 %v284
    %287 = vperm.xlu0 %286, %v282
    %v288 = vpop.permute.xlu0 %287
    %v289 = vperm.slane %v266, 3
    %v290 = vlaneseq
    %v291 = vshrl.u32 %v290, 7
    %293 = vset.pattern.permute.xlu0 %v291
    %294 = vperm.xlu0 %293, %v289
    %v295 = vpop.permute.xlu0 %294
    %v296 = vperm.slane %v266, 4
    %v297 = vlaneseq
    %v298 = vshrl.u32 %v297, 7
    %300 = vset.pattern.permute.xlu0 %v298
    %301 = vperm.xlu0 %300, %v296
    %v302 = vpop.permute.xlu0 %301
    %v303 = vperm.slane %v266, 5
    %v304 = vlaneseq
    %v305 = vshrl.u32 %v304, 7
    %307 = vset.pattern.permute.xlu0 %v305
    %308 = vperm.xlu0 %307, %v303
    %v309 = vpop.permute.xlu0 %308
    %v310 = vperm.slane %v266, 6
    %v311 = vlaneseq
    %v312 = vshrl.u32 %v311, 7
    %314 = vset.pattern.permute.xlu0 %v312
    %315 = vperm.xlu0 %314, %v310
    %v316 = vpop.permute.xlu0 %315
    %v317 = vperm.slane %v266, 7
    %v318 = vlaneseq
    %v319 = vshrl.u32 %v318, 7
    %321 = vset.pattern.permute.xlu0 %v319
    %322 = vperm.xlu0 %321, %v317
    %v323 = vpop.permute.xlu0 %322
    %v332 = vadd.f32 %v255, %v274
    %v333 = vadd.f32 %v256, %v281
    %v334 = vadd.f32 %v257, %v288
    %v335 = vadd.f32 %v258, %v295
    %v336 = vadd.f32 %v259, %v302
    %v337 = vadd.f32 %v260, %v309
    %v338 = vadd.f32 %v261, %v316
    %v339 = vadd.f32 %v262, %v323
    %348 = vset.pattern.permute.xlu0 0
    %349 = vperm.xlu0 %348, %v332
    %v350 = vpop.permute.xlu0 %349
    %351 = vset.pattern.permute.xlu0 0
    %352 = vperm.xlu0 %351, %v333
    %v353 = vpop.permute.xlu0 %352
    %354 = vset.pattern.permute.xlu0 0
    %355 = vperm.xlu0 %354, %v334
    %v356 = vpop.permute.xlu0 %355
    %357 = vset.pattern.permute.xlu0 0
    %358 = vperm.xlu0 %357, %v335
    %v359 = vpop.permute.xlu0 %358
    %360 = vset.pattern.permute.xlu0 0
    %361 = vperm.xlu0 %360, %v336
    %v362 = vpop.permute.xlu0 %361
    %363 = vset.pattern.permute.xlu0 0
    %364 = vperm.xlu0 %363, %v337
    %v365 = vpop.permute.xlu0 %364
    %366 = vset.pattern.permute.xlu0 0
    %367 = vperm.xlu0 %366, %v338
    %v368 = vpop.permute.xlu0 %367
    %369 = vset.pattern.permute.xlu0 0
    %370 = vperm.xlu0 %369, %v339
    %v371 = vpop.permute.xlu0 %370
    %v372 = vlaneseq
    %v373 = vand.u32 %v372, 127
    %v374 = vperm.slane %v350, %v373
    %v375 = vperm.slane %v353, %v373
    %v376 = vperm.slane %v356, %v373
    %v377 = vperm.slane %v359, %v373
    %v378 = vperm.slane %v362, %v373
    %v379 = vperm.slane %v365, %v373
    %v380 = vperm.slane %v368, %v373
    %v381 = vperm.slane %v371, %v373
    %vm382 = vcmask 1041409
    %v383 = vsel %vm382, %v375, %v374
    %vm384 = vcmask 1042434
    %v385 = vsel %vm384, %v376, %v383
    %vm386 = vcmask 1043459
    %v387 = vsel %vm386, %v377, %v385
    %vm388 = vcmask 1044484
    %v389 = vsel %vm388, %v378, %v387
    %vm390 = vcmask 1045509
    %v391 = vsel %vm390, %v379, %v389
    %vm392 = vcmask 1046534
    %v393 = vsel %vm392, %v380, %v391
    %vm394 = vcmask 1047559
    %v395 = vsel %vm394, %v381, %v393
    %vm397 = vcmask 64512
    %v398 = vsel %vm397, %v395, -inf
    %399 = vmax.xlane.f32.xlu0 %v398
    %v400 = vpop.xlane.xlu0 %399
    %v402 = vperm.slane %v400, 0
    %v403 = vperm.slane %v400, 1
    %v404 = vperm.slane %v400, 2
    %v405 = vperm.slane %v400, 3
    %v406 = vperm.slane %v400, 4
    %v407 = vperm.slane %v400, 5
    %v408 = vperm.slane %v400, 6
    %v409 = vperm.slane %v400, 7
    %v418 = vsub.f32 %v332, %v402
    %v419 = vsub.f32 %v333, %v403
    %v420 = vsub.f32 %v334, %v404
    %v421 = vsub.f32 %v335, %v405
    %v422 = vsub.f32 %v336, %v406
    %v423 = vsub.f32 %v337, %v407
    %v424 = vsub.f32 %v338, %v408
    %v425 = vsub.f32 %v339, %v409
    %v426 = vmul.f32 %v418, 1.442695
    %v427 = vpow.pop %v426
    %v428 = vmul.f32 %v419, 1.442695
    %v429 = vpow.pop %v428
    %v430 = vmul.f32 %v420, 1.442695
    %v431 = vpow.pop %v430
    %v432 = vmul.f32 %v421, 1.442695
    %v433 = vpow.pop %v432
    %v434 = vmul.f32 %v422, 1.442695
    %v435 = vpow.pop %v434
    %v436 = vmul.f32 %v423, 1.442695
    %v437 = vpow.pop %v436
    %v438 = vmul.f32 %v424, 1.442695
    %v439 = vpow.pop %v438
    %v440 = vmul.f32 %v425, 1.442695
    %v441 = vpow.pop %v440
    %450 = vset.pattern.permute.xlu0 0
    %451 = vperm.xlu0 %450, %v427
    %v452 = vpop.permute.xlu0 %451
    %453 = vset.pattern.permute.xlu0 0
    %454 = vperm.xlu0 %453, %v429
    %v455 = vpop.permute.xlu0 %454
    %456 = vset.pattern.permute.xlu0 0
    %457 = vperm.xlu0 %456, %v431
    %v458 = vpop.permute.xlu0 %457
    %459 = vset.pattern.permute.xlu0 0
    %460 = vperm.xlu0 %459, %v433
    %v461 = vpop.permute.xlu0 %460
    %462 = vset.pattern.permute.xlu0 0
    %463 = vperm.xlu0 %462, %v435
    %v464 = vpop.permute.xlu0 %463
    %465 = vset.pattern.permute.xlu0 0
    %466 = vperm.xlu0 %465, %v437
    %v467 = vpop.permute.xlu0 %466
    %468 = vset.pattern.permute.xlu0 0
    %469 = vperm.xlu0 %468, %v439
    %v470 = vpop.permute.xlu0 %469
    %471 = vset.pattern.permute.xlu0 0
    %472 = vperm.xlu0 %471, %v441
    %v473 = vpop.permute.xlu0 %472
    %v474 = vperm.slane %v452, %v373
    %v475 = vperm.slane %v455, %v373
    %v476 = vperm.slane %v458, %v373
    %v477 = vperm.slane %v461, %v373
    %v478 = vperm.slane %v464, %v373
    %v479 = vperm.slane %v467, %v373
    %v480 = vperm.slane %v470, %v373
    %v481 = vperm.slane %v473, %v373
    %v482 = vsel %vm382, %v475, %v474
    %v483 = vsel %vm384, %v476, %v482
    %v484 = vsel %vm386, %v477, %v483
    %v485 = vsel %vm388, %v478, %v484
    %v486 = vsel %vm390, %v479, %v485
    %v487 = vsel %vm392, %v480, %v486
    %v488 = vsel %vm394, %v481, %v487
    %v490 = vsel %vm397, %v488, 0.0
    %491 = vadd.xlane.f32.xlu0 %v490
    %v492 = vpop.xlane.xlu0 %491
    %v493 = vrcp.pop %v492
    %v494 = vmul.f32 %v492, %v493
    %v495 = vsub.f32 1.0, %v494
    %v496 = vmul.f32 %v493, %v495
    %v497 = vadd.f32 %v493, %v496
    %vm498 = vweird.f32 %v492
    %vm499 = vweird.f32 %v493
    %vm500 = vmor %vm498, %vm499
    %v501 = vsel %vm500, %v493, %v497
    %v502 = vand.u32 2147483647, %v492
    %vm503 = vcmp.eq.f32.partialorder %v502, 8.507059e+37
    %v504 = vand.u32 %v492, 2147483648
    %v505 = vor.u32 1.1754944e-38, %v504
    %v506 = vsel %vm503, %v505, %v501
    %v507 = vlog2.pop %v492
    %v508 = vmul.f32 %v507, 0.6931472
    %v510 = vperm.slane %v506, 0
    %v511 = vperm.slane %v506, 1
    %v512 = vperm.slane %v506, 2
    %v513 = vperm.slane %v506, 3
    %v514 = vperm.slane %v506, 4
    %v515 = vperm.slane %v506, 5
    %v516 = vperm.slane %v506, 6
    %v517 = vperm.slane %v506, 7
    %v526 = vmul.f32 %v427, %v510
    %v527 = vmul.f32 %v429, %v511
    %v528 = vmul.f32 %v431, %v512
    %v529 = vmul.f32 %v433, %v513
    %v530 = vmul.f32 %v435, %v514
    %v531 = vmul.f32 %v437, %v515
    %v532 = vmul.f32 %v439, %v516
    %v533 = vmul.f32 %v441, %v517
    %542 = vset.pattern.permute.xlu0 0
    %543 = vperm.xlu0 %542, %v526
    %v544 = vpop.permute.xlu0 %543
    %545 = vset.pattern.permute.xlu0 0
    %546 = vperm.xlu0 %545, %v527
    %v547 = vpop.permute.xlu0 %546
    %548 = vset.pattern.permute.xlu0 0
    %549 = vperm.xlu0 %548, %v528
    %v550 = vpop.permute.xlu0 %549
    %551 = vset.pattern.permute.xlu0 0
    %552 = vperm.xlu0 %551, %v529
    %v553 = vpop.permute.xlu0 %552
    %554 = vset.pattern.permute.xlu0 0
    %555 = vperm.xlu0 %554, %v530
    %v556 = vpop.permute.xlu0 %555
    %557 = vset.pattern.permute.xlu0 0
    %558 = vperm.xlu0 %557, %v531
    %v559 = vpop.permute.xlu0 %558
    %560 = vset.pattern.permute.xlu0 0
    %561 = vperm.xlu0 %560, %v532
    %v562 = vpop.permute.xlu0 %561
    %563 = vset.pattern.permute.xlu0 0
    %564 = vperm.xlu0 %563, %v533
    %v565 = vpop.permute.xlu0 %564
    %v566 = vperm.slane %v544, %v373
    %v567 = vperm.slane %v547, %v373
    %v568 = vperm.slane %v550, %v373
    %v569 = vperm.slane %v553, %v373
    %v570 = vperm.slane %v556, %v373
    %v571 = vperm.slane %v559, %v373
    %v572 = vperm.slane %v562, %v373
    %v573 = vperm.slane %v565, %v373
    %v574 = vsel %vm382, %v567, %v566
    %v575 = vsel %vm384, %v568, %v574
    %v576 = vsel %vm386, %v569, %v575
    %v577 = vsel %vm388, %v570, %v576
    %v578 = vsel %vm390, %v571, %v577
    %v579 = vsel %vm392, %v572, %v578
    %v580 = vsel %vm394, %v573, %v579
    %582 = vst.msk [vmem:[#allocation8] sm:$0xff] %vm397, %v580
    %vm583 = vcmp.eq.f32.partialorder %v332, %v402
    %vm584 = vcmp.eq.f32.partialorder %v333, %v403
    %vm585 = vcmp.eq.f32.partialorder %v334, %v404
    %vm586 = vcmp.eq.f32.partialorder %v335, %v405
    %vm587 = vcmp.eq.f32.partialorder %v336, %v406
    %vm588 = vcmp.eq.f32.partialorder %v337, %v407
    %vm589 = vcmp.eq.f32.partialorder %v338, %v408
    %vm590 = vcmp.eq.f32.partialorder %v339, %v409
    %v591 = vlaneseq
    %v592 = vshrl.u32 %v591, 7
    %594 = vset.pattern.permute.xlu0 %v592
    %595 = vperm.xlu0 %594, %v373
    %v596 = vpop.permute.xlu0 %595
    %v597 = vsel %vm583, %v596, 8
    %v598 = vsel %vm584, %v596, 8
    %v599 = vsel %vm585, %v596, 8
    %v600 = vsel %vm586, %v596, 8
    %v601 = vsel %vm587, %v596, 8
    %v602 = vsel %vm588, %v596, 8
    %v603 = vsel %vm589, %v596, 8
    %v604 = vsel %vm590, %v596, 8
    %605 = vset.pattern.permute.xlu0 0
    %606 = vperm.xlu0 %605, %v597
    %v607 = vpop.permute.xlu0 %606
    %608 = vset.pattern.permute.xlu0 0
    %609 = vperm.xlu0 %608, %v598
    %v610 = vpop.permute.xlu0 %609
    %611 = vset.pattern.permute.xlu0 0
    %612 = vperm.xlu0 %611, %v599
    %v613 = vpop.permute.xlu0 %612
    %614 = vset.pattern.permute.xlu0 0
    %615 = vperm.xlu0 %614, %v600
    %v616 = vpop.permute.xlu0 %615
    %617 = vset.pattern.permute.xlu0 0
    %618 = vperm.xlu0 %617, %v601
    %v619 = vpop.permute.xlu0 %618
    %620 = vset.pattern.permute.xlu0 0
    %621 = vperm.xlu0 %620, %v602
    %v622 = vpop.permute.xlu0 %621
    %623 = vset.pattern.permute.xlu0 0
    %624 = vperm.xlu0 %623, %v603
    %v625 = vpop.permute.xlu0 %624
    %626 = vset.pattern.permute.xlu0 0
    %627 = vperm.xlu0 %626, %v604
    %v628 = vpop.permute.xlu0 %627
    %v629 = vperm.slane %v607, %v373
    %v630 = vperm.slane %v610, %v373
    %v631 = vperm.slane %v613, %v373
    %v632 = vperm.slane %v616, %v373
    %v633 = vperm.slane %v619, %v373
    %v634 = vperm.slane %v622, %v373
    %v635 = vperm.slane %v625, %v373
    %v636 = vperm.slane %v628, %v373
    %v637 = vsel %vm382, %v630, %v629
    %v638 = vsel %vm384, %v631, %v637
    %v639 = vsel %vm386, %v632, %v638
    %v640 = vsel %vm388, %v633, %v639
    %v641 = vsel %vm390, %v634, %v640
    %v642 = vsel %vm392, %v635, %v641
    %v643 = vsel %vm394, %v636, %v642
    %v644 = vsel %vm397, %v643, 2147483647
    %v645 = vand.u32 %v644, 65535
    %v646 = vshra.s32 %v644, 16
    %v647 = vcvt.s32.f32 %v645
    %v648 = vcvt.s32.f32 %v646
    %649 = vmin.xlane.f32.xlu0 %v648
    %v650 = vpop.xlane.xlu0 %649
    %vm651 = vcmp.eq.f32.partialorder %v648, %v650
    %v652 = vsel %vm651, %v647, inf
    %653 = vmin.xlane.f32.xlu0 %v652
    %v654 = vpop.xlane.xlu0 %653
    %v655 = vcvt.f32.s32 %v654
    %v656 = vcvt.f32.s32 %v650
    %v657 = vshll.u32 %v656, 16
    %v658 = vadd.s32 %v657, %v655
    %vm659 = vcmask 7168
    %660 = vst.msk [vmem:[%s5] sm:$0xff] %vm659, %v658
    %661 = vst.msk [vmem:[%s6] sm:$0xff] %vm659, %v506
    %v662 = vsub.f32 0.0, %v508
    %663 = vst.msk [vmem:[%s7] sm:$0xff] %vm659, %v662
    // Predicated region
    $region26: #{tpu_custom_call.1} parent=1 // pred_check
      _
    $region27: #{tpu_custom_call.1} parent=1 // pred_check_branch
      %665 = sbr.rel (0) target = $region29
    $region28: #{tpu_custom_call.1} parent=1 // pred_region
      %667 = vsyncadd [#allocation5], 0
      %s669 = sshll.u32 [#allocation8], 4
      %s670 = int_to_ptr.vmem [resolvable:$true] %s669
      %s671 = sshll.u32 %s4, 4
      %s672 = int_to_ptr.hbm [resolvable:$true] %s671
      %674 = dma.vmem_to_hbm [thread:$0]  %s670, 128, %s672, [#allocation5]
    $region29: #{tpu_custom_call.1} parent=1 // pred_fallthru
      _
    // Predicated region
    $region30: #{tpu_custom_call.1} parent=1 // pred_check
      _
    $region31: #{tpu_custom_call.1} parent=1 // pred_check_branch
      %676 = sbr.rel (0) target = $region33
    $region32: #{tpu_custom_call.1} parent=1 // pred_region
      _
    $region33: #{tpu_custom_call.1} parent=1 // pred_fallthru
      _
    // Predicated region
    $region34: #{tpu_custom_call.1} parent=1 // pred_check
      _
    $region35: #{tpu_custom_call.1} parent=1 // pred_check_branch
      %678 = sbr.rel (0) target = $region37
    $region36: #{tpu_custom_call.1} parent=1 // pred_region
      _
    $region37: #{tpu_custom_call.1} parent=1 // pred_fallthru
      _
    // Predicated region
    $region38: #{tpu_custom_call.1} parent=1 // pred_check
      _
    $region39: #{tpu_custom_call.1} parent=1 // pred_check_branch
      %680 = sbr.rel (0) target = $region41
    $region40: #{tpu_custom_call.1} parent=1 // pred_region
      _
    $region41: #{tpu_custom_call.1} parent=1 // pred_fallthru
      _
    // Predicated region
    $region42: #{tpu_custom_call.1} parent=1 // pred_check
      _
    $region43: #{tpu_custom_call.1} parent=1 // pred_check_branch
      %682 = sbr.rel (0) target = $region45
    $region44: #{tpu_custom_call.1} parent=1 // pred_region
      %684 = dma.done [#allocation5], 128
    $region45: #{tpu_custom_call.1} parent=1 // pred_fallthru
      _
    // Predicated region
    $region46: #{tpu_custom_call.1} parent=1 // pred_check
      _
    $region47: #{tpu_custom_call.1} parent=1 // pred_check_branch
      %686 = sbr.rel (0) target = $region49
    $region48: #{tpu_custom_call.1} parent=1 // pred_region
      _
    $region49: #{tpu_custom_call.1} parent=1 // pred_fallthru
      _
    // Predicated region
    $region50: #{tpu_custom_call.1} parent=1 // pred_check
      _
    $region51: #{tpu_custom_call.1} parent=1 // pred_check_branch
      %688 = sbr.rel (0) target = $region53
    $region52: #{tpu_custom_call.1} parent=1 // pred_region
      _
    $region53: #{tpu_custom_call.1} parent=1 // pred_fallthru
      _
    // Predicated region
    $region54: #{tpu_custom_call.1} parent=1 // pred_check
      _
    $region55: #{tpu_custom_call.1} parent=1 // pred_check_branch
      %690 = sbr.rel (0) target = $region57
    $region56: #{tpu_custom_call.1} parent=1 // pred_region
      _
    $region57: #{tpu_custom_call.1} parent=1 // pred_fallthru
      _
    %691 = vsyncpa [#allocation4], 1
    %692 = vsyncpa [#allocation7], 1
    %693 = vsyncpa [#allocation5], 1

</llo_original>
